<compile_context>
chip_gen: v5e
topology: v5e:2x2
jax: 0.10.0
libtpu: 0.0.40
codegen_flags: <defaults>
</compile_context>

<pallas_src>
import math
import functools

import jax
import jax.numpy as jnp
from jax import lax
from jax.experimental import pallas as pl
from jax.experimental.pallas import tpu as pltpu


# ------------------------------ fused kernel ------------------------------

def _self_attention_kernel(x_ref, wq_ref, wk_ref, wv_ref,
                           bq_ref, bk_ref, bv_ref, o_ref, *, scale):
    # One batch element per grid step; everything stays in VMEM/vregs.
    x = x_ref[0]                                                    # (S, D)

    # Projections (weights are pre-transposed to (D, dim_*)).
    q = jnp.dot(x, wq_ref[...], preferred_element_type=jnp.float32) + bq_ref[...]
    k = jnp.dot(x, wk_ref[...], preferred_element_type=jnp.float32) + bk_ref[...]
    v = jnp.dot(x, wv_ref[...], preferred_element_type=jnp.float32) + bv_ref[...]

    # scores = q @ k^T, expressed as a contraction of the LAST dims of q and k
    # so no explicit transpose of K is materialized (MXU consumes K directly).
    s = lax.dot_general(q, k, (((1,), (1,)), ((), ())),
                        preferred_element_type=jnp.float32) * scale  # (S, S)

    # Numerically-stable softmax; approx reciprocal runs on the EUP slot.
    m = jnp.max(s, axis=-1, keepdims=True)
    p = jnp.exp(s - m)
    p = p * pl.reciprocal(jnp.sum(p, axis=-1, keepdims=True), approx=True)

    o_ref[0] = jnp.dot(p, v, preferred_element_type=jnp.float32).astype(o_ref.dtype)


# ------------------------------ wrapper ------------------------------

def prepare_params(params):
    """One-time weight prep (outside the hot path): PyTorch (out, in) weights ->
    (in, out) so the kernel computes x @ W_t; biases -> (1, out) rows."""
    return {
        "wq_t": jnp.transpose(params["wq"]), "bq": params["bq"].reshape(1, -1),
        "wk_t": jnp.transpose(params["wk"]), "bk": params["bk"].reshape(1, -1),
        "wv_t": jnp.transpose(params["wv"]), "bv": params["bv"].reshape(1, -1),
    }


def self_attention(X, prepared, *, dim_k):
    """X: (B, S, D) -> (B, S, dim_v). Single fused pallas_call."""
    B, S, D = X.shape
    dim_q = prepared["wq_t"].shape[1]
    dkk = prepared["wk_t"].shape[1]
    dim_v = prepared["wv_t"].shape[1]
    scale = 1.0 / math.sqrt(dim_k)          # module semantics: sqrt(dim_k)

    kernel = functools.partial(_self_attention_kernel, scale=scale)
    return pl.pallas_call(
        kernel,
        out_shape=jax.ShapeDtypeStruct((B, S, dim_v), jnp.float32),
        grid=(B,),
        in_specs=[
            pl.BlockSpec((1, S, D), lambda b: (b, 0, 0)),       # X slice
            pl.BlockSpec((D, dim_q), lambda b: (0, 0)),         # Wq^T (resident)
            pl.BlockSpec((D, dkk),   lambda b: (0, 0)),         # Wk^T
            pl.BlockSpec((D, dim_v), lambda b: (0, 0)),         # Wv^T
            pl.BlockSpec((1, dim_q), lambda b: (0, 0)),         # bq
            pl.BlockSpec((1, dkk),   lambda b: (0, 0)),         # bk
            pl.BlockSpec((1, dim_v), lambda b: (0, 0)),         # bv
        ],
        out_specs=pl.BlockSpec((1, S, dim_v), lambda b: (b, 0, 0)),
        compiler_params=pltpu.CompilerParams(
            dimension_semantics=("parallel",)),                 # shard B over TCs
    )(X, prepared["wq_t"], prepared["wk_t"], prepared["wv_t"],
      prepared["bq"], prepared["bk"], prepared["bv"])


# --------------------------- pure-JAX reference ---------------------------

def ref_forward(X, params, *, dim_k):
    lin = lambda x, w, b: jnp.matmul(x, w.T) + b
    q = lin(X, params["wq"], params["bq"])
    k = lin(X, params["wk"], params["bk"])
    v = lin(X, params["wv"], params["bv"])
    s = jnp.matmul(q, jnp.swapaxes(k, -1, -2)) / math.sqrt(dim_k)
    return jnp.matmul(jax.nn.softmax(s, axis=-1), v)


# --------------------------------- main ---------------------------------

if __name__ == "__main__":
    B, S = 2, 8
    input_dim = 32
    dim_q = dim_k = dim_v = 32

    key = jax.random.PRNGKey(0)
    ks = jax.random.split(key, 7)
    init = lambda k, shape, fan_in: (jax.random.uniform(k, shape, jnp.float32,
                                                        -1.0, 1.0) / math.sqrt(fan_in))
    params = {
        "wq": init(ks[0], (dim_q, input_dim), input_dim),
        "bq": init(ks[1], (dim_q,), input_dim),
        "wk": init(ks[2], (dim_k, input_dim), input_dim),
        "bk": init(ks[3], (dim_k,), input_dim),
        "wv": init(ks[4], (dim_v, input_dim), input_dim),
        "bv": init(ks[5], (dim_v,), input_dim),
    }
    X = jax.random.normal(ks[6], (B, S, input_dim), jnp.float32)

    prepared = prepare_params(params)        # one-time weight transpose
    out = self_attention(X, prepared, dim_k=dim_k)
    out = jax.block_until_ready(out)

    ref = ref_forward(X, params, dim_k=dim_k)
    assert out.shape == (B, S, dim_v)
    # approx=True reciprocal changes results at ~1e-3 level -> loosened tolerance.
    assert jnp.allclose(out, ref, atol=1e-2, rtol=1e-2), "mismatch vs reference"

    print("KERNEL_OK")
</pallas_src>

<mosaic_0001>
module attributes {stable_mosaic.version = 11 : i64} {
  func.func @_self_attention_kernel(%arg0: i32, %arg1: memref<1x8x32xf32, #tpu.memory_space<vmem>>, %arg2: memref<32x32xf32, #tpu.memory_space<vmem>>, %arg3: memref<32x32xf32, #tpu.memory_space<vmem>>, %arg4: memref<32x32xf32, #tpu.memory_space<vmem>>, %arg5: memref<1x32xf32, #tpu.memory_space<vmem>>, %arg6: memref<1x32xf32, #tpu.memory_space<vmem>>, %arg7: memref<1x32xf32, #tpu.memory_space<vmem>>, %arg8: memref<1x8x32xf32, #tpu.memory_space<vmem>>) attributes {dimension_semantics = [#tpu.dimension_semantics<parallel>], iteration_bounds = array<i64: 2>, scalar_prefetch = 0 : i64, scratch_operands = 0 : i64, tpu.core_type = #tpu.core_type<tc>, window_params = [{transform_indices = @transform_0, window_bounds = array<i64: 1, 8, 32>}, {pipeline_mode = #tpu.pipeline_mode<synchronous>, transform_indices = @transform_1, window_bounds = array<i64: 32, 32>}, {pipeline_mode = #tpu.pipeline_mode<synchronous>, transform_indices = @transform_2, window_bounds = array<i64: 32, 32>}, {pipeline_mode = #tpu.pipeline_mode<synchronous>, transform_indices = @transform_3, window_bounds = array<i64: 32, 32>}, {pipeline_mode = #tpu.pipeline_mode<synchronous>, transform_indices = @transform_4, window_bounds = array<i64: 1, 32>}, {pipeline_mode = #tpu.pipeline_mode<synchronous>, transform_indices = @transform_5, window_bounds = array<i64: 1, 32>}, {pipeline_mode = #tpu.pipeline_mode<synchronous>, transform_indices = @transform_6, window_bounds = array<i64: 1, 32>}, {transform_indices = @transform_7, window_bounds = array<i64: 1, 8, 32>}]} {
    %c0 = arith.constant 0 : index
    %c0_0 = arith.constant 0 : index
    %c0_1 = arith.constant 0 : index
    %0 = vector.load %arg1[%c0, %c0_0, %c0_1] : memref<1x8x32xf32, #tpu.memory_space<vmem>>, vector<1x8x32xf32>
    %1 = vector.shape_cast %0 : vector<1x8x32xf32> to vector<8x32xf32>
    %c0_2 = arith.constant 0 : index
    %c0_3 = arith.constant 0 : index
    %2 = vector.load %arg2[%c0_2, %c0_3] : memref<32x32xf32, #tpu.memory_space<vmem>>, vector<32x32xf32>
    %cst = arith.constant dense<0.000000e+00> : vector<8x32xf32>
    %3 = tpu.matmul %1, %2, %cst {dimension_numbers = #tpu.dot_dimension_numbers<[1], [0], [0], [1], [0, 0, 1, 1], [], []>} : vector<8x32xf32>, vector<32x32xf32>, vector<8x32xf32> -> vector<8x32xf32>
    %c0_4 = arith.constant 0 : index
    %c0_5 = arith.constant 0 : index
    %4 = vector.load %arg5[%c0_4, %c0_5] : memref<1x32xf32, #tpu.memory_space<vmem>>, vector<1x32xf32>
    %5 = vector.broadcast %4 : vector<1x32xf32> to vector<8x32xf32>
    %6 = arith.addf %3, %5 : vector<8x32xf32>
    %c0_6 = arith.constant 0 : index
    %c0_7 = arith.constant 0 : index
    %7 = vector.load %arg3[%c0_6, %c0_7] : memref<32x32xf32, #tpu.memory_space<vmem>>, vector<32x32xf32>
    %cst_8 = arith.constant dense<0.000000e+00> : vector<8x32xf32>
    %8 = tpu.matmul %1, %7, %cst_8 {dimension_numbers = #tpu.dot_dimension_numbers<[1], [0], [0], [1], [0, 0, 1, 1], [], []>} : vector<8x32xf32>, vector<32x32xf32>, vector<8x32xf32> -> vector<8x32xf32>
    %c0_9 = arith.constant 0 : index
    %c0_10 = arith.constant 0 : index
    %9 = vector.load %arg6[%c0_9, %c0_10] : memref<1x32xf32, #tpu.memory_space<vmem>>, vector<1x32xf32>
    %10 = vector.broadcast %9 : vector<1x32xf32> to vector<8x32xf32>
    %11 = arith.addf %8, %10 : vector<8x32xf32>
    %c0_11 = arith.constant 0 : index
    %c0_12 = arith.constant 0 : index
    %12 = vector.load %arg4[%c0_11, %c0_12] : memref<32x32xf32, #tpu.memory_space<vmem>>, vector<32x32xf32>
    %cst_13 = arith.constant dense<0.000000e+00> : vector<8x32xf32>
    %13 = tpu.matmul %1, %12, %cst_13 {dimension_numbers = #tpu.dot_dimension_numbers<[1], [0], [0], [1], [0, 0, 1, 1], [], []>} : vector<8x32xf32>, vector<32x32xf32>, vector<8x32xf32> -> vector<8x32xf32>
    %c0_14 = arith.constant 0 : index
    %c0_15 = arith.constant 0 : index
    %14 = vector.load %arg7[%c0_14, %c0_15] : memref<1x32xf32, #tpu.memory_space<vmem>>, vector<1x32xf32>
    %15 = vector.broadcast %14 : vector<1x32xf32> to vector<8x32xf32>
    %16 = arith.addf %13, %15 : vector<8x32xf32>
    %cst_16 = arith.constant dense<0.000000e+00> : vector<8x8xf32>
    %17 = tpu.matmul %6, %11, %cst_16 {dimension_numbers = #tpu.dot_dimension_numbers<[1], [1], [0], [0], [0, 0, 1, 0], [], []>} : vector<8x32xf32>, vector<8x32xf32>, vector<8x8xf32> -> vector<8x8xf32>
    %cst_17 = arith.constant 0.176776692 : f32
    %18 = vector.broadcast %cst_17 : f32 to vector<8x8xf32>
    %19 = arith.mulf %17, %18 : vector<8x8xf32>
    %cst_18 = arith.constant dense<0xFF800000> : vector<8xf32>
    %20 = vector.multi_reduction <maximumf>, %19, %cst_18 [1] : vector<8x8xf32> to vector<8xf32>
    %21 = vector.shape_cast %20 : vector<8xf32> to vector<8x1xf32>
    %22 = vector.broadcast %21 : vector<8x1xf32> to vector<8x8xf32>
    %23 = arith.subf %19, %22 : vector<8x8xf32>
    %24 = math.exp %23 : vector<8x8xf32>
    %cst_19 = arith.constant dense<0.000000e+00> : vector<8xf32>
    %25 = vector.multi_reduction <add>, %24, %cst_19 [1] : vector<8x8xf32> to vector<8xf32>
    %26 = vector.shape_cast %25 : vector<8xf32> to vector<8x1xf32>
    %27 = tpu.reciprocal %26 {approx = true} : vector<8x1xf32> -> vector<8x1xf32>
    %28 = vector.broadcast %27 : vector<8x1xf32> to vector<8x8xf32>
    %29 = arith.mulf %24, %28 : vector<8x8xf32>
    %cst_20 = arith.constant dense<0.000000e+00> : vector<8x32xf32>
    %30 = tpu.matmul %29, %16, %cst_20 {dimension_numbers = #tpu.dot_dimension_numbers<[1], [0], [0], [1], [0, 0, 1, 1], [], []>} : vector<8x8xf32>, vector<8x32xf32>, vector<8x32xf32> -> vector<8x32xf32>
    %c0_21 = arith.constant 0 : index
    %c0_22 = arith.constant 0 : index
    %c0_23 = arith.constant 0 : index
    %31 = vector.load %arg8[%c0_21, %c0_22, %c0_23] : memref<1x8x32xf32, #tpu.memory_space<vmem>>, vector<1x8x32xf32>
    %32 = vector.shape_cast %31 : vector<1x8x32xf32> to vector<8x32xf32>
    %33 = vector.shape_cast %30 : vector<8x32xf32> to vector<1x8x32xf32>
    tpu.vector_store %arg8[%c0_21, %c0_22, %c0_23], %33 {strides = array<i32>} : memref<1x8x32xf32, #tpu.memory_space<vmem>>, vector<1x8x32xf32>,
    return
  }
  func.func @transform_0(%arg0: i32) -> (i32, i32, i32) {
    %c0_i32 = arith.constant 0 : i32
    %c0_i32_0 = arith.constant 0 : i32
    %c0_i32_1 = arith.constant 0 : i32
    return %arg0, %c0_i32, %c0_i32_0 : i32, i32, i32
  }
  func.func @transform_1(%arg0: i32) -> (i32, i32) {
    %c0_i32 = arith.constant 0 : i32
    %c0_i32_0 = arith.constant 0 : i32
    %c0_i32_1 = arith.constant 0 : i32
    return %c0_i32, %c0_i32_0 : i32, i32
  }
  func.func @transform_2(%arg0: i32) -> (i32, i32) {
    %c0_i32 = arith.constant 0 : i32
    %c0_i32_0 = arith.constant 0 : i32
    %c0_i32_1 = arith.constant 0 : i32
    return %c0_i32, %c0_i32_0 : i32, i32
  }
  func.func @transform_3(%arg0: i32) -> (i32, i32) {
    %c0_i32 = arith.constant 0 : i32
    %c0_i32_0 = arith.constant 0 : i32
    %c0_i32_1 = arith.constant 0 : i32
    return %c0_i32, %c0_i32_0 : i32, i32
  }
  func.func @transform_4(%arg0: i32) -> (i32, i32) {
    %c0_i32 = arith.constant 0 : i32
    %c0_i32_0 = arith.constant 0 : i32
    %c0_i32_1 = arith.constant 0 : i32
    return %c0_i32, %c0_i32_0 : i32, i32
  }
  func.func @transform_5(%arg0: i32) -> (i32, i32) {
    %c0_i32 = arith.constant 0 : i32
    %c0_i32_0 = arith.constant 0 : i32
    %c0_i32_1 = arith.constant 0 : i32
    return %c0_i32, %c0_i32_0 : i32, i32
  }
  func.func @transform_6(%arg0: i32) -> (i32, i32) {
    %c0_i32 = arith.constant 0 : i32
    %c0_i32_0 = arith.constant 0 : i32
    %c0_i32_1 = arith.constant 0 : i32
    return %c0_i32, %c0_i32_0 : i32, i32
  }
  func.func @transform_7(%arg0: i32) -> (i32, i32, i32) {
    %c0_i32 = arith.constant 0 : i32
    %c0_i32_0 = arith.constant 0 : i32
    %c0_i32_1 = arith.constant 0 : i32
    return %arg0, %c0_i32, %c0_i32_0 : i32, i32, i32
  }
}

</mosaic_0001>

<llo_original>
// kernel: tpu_custom_call.1
$region0: #{tpu_custom_call.1}
  #allocation0 [shape = 'u32[]', space=smem, size = 0x4, offset = 0x4, fixed_abs, tag = 'smem constant byte address 0x4 - core index']
  #allocation1 [shape = 'u32[72,128]{1,0:T(1,128)}', space=vmem, size = 0x9000, scoped, tag = 'internal scratch']
  %s0 = inlined_call_operand.hbm [shape: f32[2,8,32], index: 0, kind: input, shape index: {}]
  %s1 = inlined_call_operand.hbm [shape: f32[32,32], index: 1, kind: input, shape index: {}]
  %s2 = inlined_call_operand.hbm [shape: f32[32,32], index: 2, kind: input, shape index: {}]
  %s3 = inlined_call_operand.hbm [shape: f32[32,32], index: 3, kind: input, shape index: {}]
  %s4 = inlined_call_operand.vmem [shape: f32[1,32], index: 4, kind: input, shape index: {}]
  %s5 = inlined_call_operand.vmem [shape: f32[1,32], index: 5, kind: input, shape index: {}]
  %s6 = inlined_call_operand.vmem [shape: f32[1,32], index: 6, kind: input, shape index: {}]
  %s7 = inlined_call_operand.hbm [shape: f32[2,8,32], index: 7, kind: output, shape index: {}]
  %s8 = sld [smem:[#allocation0]]
  $region77: #{tpu_custom_call.1} parent=0
    _
  %s10 = ssub.s32 1, %s8
  %s11 = scalar_select 0, %s10, %s8
  $region1: #{tpu_custom_call.1} parent=0
    #allocation2 [shape = 'u8[8192]{0}', space=vmem, size = 0x2000, scoped, tag = 'input window, operand 0']
    #allocation3 [shape = 's32[2]{0}', space=sflag, size = 0x8, scoped, tag = 'scoped memory for tpu_custom_call.1']
    #allocation4 [shape = 's32[2]{0}', space=sflag, size = 0x8, scoped, tag = 'scoped memory for tpu_custom_call.1']
    #allocation5 [shape = 'u8[16384]{0}', space=vmem, size = 0x4000, scoped, tag = 'input window, operand 1, single buffered']
    #allocation6 [shape = 's32[1]{0}', space=sflag, size = 0x4, scoped, tag = 'scoped memory for tpu_custom_call.1']
    #allocation7 [shape = 'u8[16384]{0}', space=vmem, size = 0x4000, scoped, tag = 'input window, operand 2, single buffered']
    #allocation8 [shape = 'u8[16384]{0}', space=vmem, size = 0x4000, scoped, tag = 'input window, operand 3, single buffered']
    #allocation9 [shape = 's32[1]{0}', space=sflag, size = 0x4, scoped, tag = 'scoped memory for tpu_custom_call.1']
    #allocation10 [shape = 'u8[8192]{0}', space=vmem, size = 0x2000, scoped, tag = 'output window, operand 0']
    %12 = vsyncpa [#allocation3], 0
    %s13 = scalar_lea.sflag [#allocation3], 1
    %14 = vsyncpa %s13, 0
    %15 = vsyncpa [#allocation6], 0
    %16 = vsyncpa [#allocation9], 0
    %17 = vsyncpa [#allocation4], 0
    %s18 = scalar_lea.sflag [#allocation4], 1
    %19 = vsyncpa %s18, 0
    loop: start=0, step=1, limit=4
    $region2: #{tpu_custom_call.1} parent=1 // loop_pre_header
      _
    $region3: #{tpu_custom_call.1} parent=1 // loop_header
      %s21 = sphi 0, %s25
      %p22 = scmp.ge.s32.totalorder %s21, 4
      %s31 = sphi 0, %s33
      %s34 = sphi 0, %s31
      %s35 = sphi 0, %s34
      %s51 = sphi 0, %s35
      %s55 = sphi 0, %s55
      %s57 = sphi 0, %s55
      %s58 = sphi 0, %s57
      %s72 = sphi 0, %s58
      %s76 = sphi 0, %s76
      %s78 = sphi 0, %s76
      %s79 = sphi 0, %s78
      %s93 = sphi 0, %s79
      %s97 = sphi 0, %s97
      %s99 = sphi 0, %s97
      %s100 = sphi 0, %s99
      %s114 = sphi 0, %s100
      %s118 = sphi 0, %s118
      %s120 = sphi 0, %s118
      %s121 = sphi 0, %s120
      %s135 = sphi 0, %s121
      %s139 = sphi 0, %s139
      %s141 = sphi 0, %s139
      %s142 = sphi 0, %s141
      %s156 = sphi 0, %s142
      %s160 = sphi 0, %s160
      %s162 = sphi 0, %s160
      %s163 = sphi 0, %s162
      %s177 = sphi 0, %s163
      %s183 = sphi 0, %s185
      %s186 = sphi 0, %s183
      %s187 = sphi 0, %s186
      %s203 = sphi 0, %s187
    $region4: #{tpu_custom_call.1} parent=1 // loop_header_branch
      %24 = sbr.rel (%p22) target = $region8
    $region5: #{tpu_custom_call.1} parent=1 // loop_body
      %s26 = ssub.s32 %s21, 1
      %s27 = ssub.s32 %s21, 2
      %s28 = sadd.s32 %s21, 1
      %s29 = ssub.s32 %s21, %s28
      %p30 = scmp.eq.s32.totalorder %s29, 0
      %s32 = sadd.s32 %s31, 1
      %s33 = scalar_select %p30, %s31, %s32
      %p36 = pneg %p30
      %p37 = scmp.eq.s32.totalorder %s21, 1
      %p38 = por %p36, %p37
      %p39 = scmp.ne.s32.totalorder %s31, %s34
      %p40 = scmp.eq.s32.totalorder %s21, 0
      %p41 = por %p39, %p40
      %p42 = scmp.ne.s32.totalorder %s31, %s34
      %p43 = scmp.eq.s32.totalorder %s26, 1
      %p44 = por %p42, %p43
      %p45 = scmp.ne.s32.totalorder %s34, %s35
      %p46 = scmp.eq.s32.totalorder %s26, 0
      %p47 = por %p45, %p46
      %p48 = scmp.ne.s32.totalorder %s34, %s35
      %p49 = scmp.eq.s32.totalorder %s27, 1
      %p50 = por %p48, %p49
      %p52 = scmp.ne.s32.totalorder %s35, %s51
      %p53 = scmp.eq.s32.totalorder %s27, 0
      %p54 = por %p52, %p53
      %s56 = sadd.s32 %s55, 1
      %p59 = scmp.eq.s32.totalorder %s21, 1
      %p60 = scmp.ne.s32.totalorder %s55, %s57
      %p61 = scmp.eq.s32.totalorder %s21, 0
      %p62 = por %p60, %p61
      %p63 = scmp.ne.s32.totalorder %s55, %s57
      %p64 = scmp.eq.s32.totalorder %s26, 1
      %p65 = por %p63, %p64
      %p66 = scmp.ne.s32.totalorder %s57, %s58
      %p67 = scmp.eq.s32.totalorder %s26, 0
      %p68 = por %p66, %p67
      %p69 = scmp.ne.s32.totalorder %s57, %s58
      %p70 = scmp.eq.s32.totalorder %s27, 1
      %p71 = por %p69, %p70
      %p73 = scmp.ne.s32.totalorder %s58, %s72
      %p74 = scmp.eq.s32.totalorder %s27, 0
      %p75 = por %p73, %p74
      %s77 = sadd.s32 %s76, 1
      %p80 = scmp.eq.s32.totalorder %s21, 1
      %p81 = scmp.ne.s32.totalorder %s76, %s78
      %p82 = scmp.eq.s32.totalorder %s21, 0
      %p83 = por %p81, %p82
      %p84 = scmp.ne.s32.totalorder %s76, %s78
      %p85 = scmp.eq.s32.totalorder %s26, 1
      %p86 = por %p84, %p85
      %p87 = scmp.ne.s32.totalorder %s78, %s79
      %p88 = scmp.eq.s32.totalorder %s26, 0
      %p89 = por %p87, %p88
      %p90 = scmp.ne.s32.totalorder %s78, %s79
      %p91 = scmp.eq.s32.totalorder %s27, 1
      %p92 = por %p90, %p91
      %p94 = scmp.ne.s32.totalorder %s79, %s93
      %p95 = scmp.eq.s32.totalorder %s27, 0
      %p96 = por %p94, %p95
      %s98 = sadd.s32 %s97, 1
      %p101 = scmp.eq.s32.totalorder %s21, 1
      %p102 = scmp.ne.s32.totalorder %s97, %s99
      %p103 = scmp.eq.s32.totalorder %s21, 0
      %p104 = por %p102, %p103
      %p105 = scmp.ne.s32.totalorder %s97, %s99
      %p106 = scmp.eq.s32.totalorder %s26, 1
      %p107 = por %p105, %p106
      %p108 = scmp.ne.s32.totalorder %s99, %s100
      %p109 = scmp.eq.s32.totalorder %s26, 0
      %p110 = por %p108, %p109
      %p111 = scmp.ne.s32.totalorder %s99, %s100
      %p112 = scmp.eq.s32.totalorder %s27, 1
      %p113 = por %p111, %p112
      %p115 = scmp.ne.s32.totalorder %s100, %s114
      %p116 = scmp.eq.s32.totalorder %s27, 0
      %p117 = por %p115, %p116
      %s119 = sadd.s32 %s118, 1
      %p122 = scmp.eq.s32.totalorder %s21, 1
      %p123 = scmp.ne.s32.totalorder %s118, %s120
      %p124 = scmp.eq.s32.totalorder %s21, 0
      %p125 = por %p123, %p124
      %p126 = scmp.ne.s32.totalorder %s118, %s120
      %p127 = scmp.eq.s32.totalorder %s26, 1
      %p128 = por %p126, %p127
      %p129 = scmp.ne.s32.totalorder %s120, %s121
      %p130 = scmp.eq.s32.totalorder %s26, 0
      %p131 = por %p129, %p130
      %p132 = scmp.ne.s32.totalorder %s120, %s121
      %p133 = scmp.eq.s32.totalorder %s27, 1
      %p134 = por %p132, %p133
      %p136 = scmp.ne.s32.totalorder %s121, %s135
      %p137 = scmp.eq.s32.totalorder %s27, 0
      %p138 = por %p136, %p137
      %s140 = sadd.s32 %s139, 1
      %p143 = scmp.eq.s32.totalorder %s21, 1
      %p144 = scmp.ne.s32.totalorder %s139, %s141
      %p145 = scmp.eq.s32.totalorder %s21, 0
      %p146 = por %p144, %p145
      %p147 = scmp.ne.s32.totalorder %s139, %s141
      %p148 = scmp.eq.s32.totalorder %s26, 1
      %p149 = por %p147, %p148
      %p150 = scmp.ne.s32.totalorder %s141, %s142
      %p151 = scmp.eq.s32.totalorder %s26, 0
      %p152 = por %p150, %p151
      %p153 = scmp.ne.s32.totalorder %s141, %s142
      %p154 = scmp.eq.s32.totalorder %s27, 1
      %p155 = por %p153, %p154
      %p157 = scmp.ne.s32.totalorder %s142, %s156
      %p158 = scmp.eq.s32.totalorder %s27, 0
      %p159 = por %p157, %p158
      %s161 = sadd.s32 %s160, 1
      %p164 = scmp.eq.s32.totalorder %s21, 1
      %p165 = scmp.ne.s32.totalorder %s160, %s162
      %p166 = scmp.eq.s32.totalorder %s21, 0
      %p167 = por %p165, %p166
      %p168 = scmp.ne.s32.totalorder %s160, %s162
      %p169 = scmp.eq.s32.totalorder %s26, 1
      %p170 = por %p168, %p169
      %p171 = scmp.ne.s32.totalorder %s162, %s163
      %p172 = scmp.eq.s32.totalorder %s26, 0
      %p173 = por %p171, %p172
      %p174 = scmp.ne.s32.totalorder %s162, %s163
      %p175 = scmp.eq.s32.totalorder %s27, 1
      %p176 = por %p174, %p175
      %p178 = scmp.ne.s32.totalorder %s163, %s177
      %p179 = scmp.eq.s32.totalorder %s27, 0
      %p180 = por %p178, %p179
      %s181 = ssub.s32 %s21, %s28
      %p182 = scmp.eq.s32.totalorder %s181, 0
      %s184 = sadd.s32 %s183, 1
      %s185 = scalar_select %p182, %s183, %s184
      %p188 = pneg %p182
      %p189 = scmp.eq.s32.totalorder %s21, 1
      %p190 = por %p188, %p189
      %p191 = scmp.ne.s32.totalorder %s183, %s186
      %p192 = scmp.eq.s32.totalorder %s21, 0
      %p193 = por %p191, %p192
      %p194 = scmp.ne.s32.totalorder %s183, %s186
      %p195 = scmp.eq.s32.totalorder %s26, 1
      %p196 = por %p194, %p195
      %p197 = scmp.ne.s32.totalorder %s186, %s187
      %p198 = scmp.eq.s32.totalorder %s26, 0
      %p199 = por %p197, %p198
      %p200 = scmp.ne.s32.totalorder %s186, %s187
      %p201 = scmp.eq.s32.totalorder %s27, 1
      %p202 = por %p200, %p201
      %p204 = scmp.ne.s32.totalorder %s187, %s203
      %p205 = scmp.eq.s32.totalorder %s27, 0
      %p206 = por %p204, %p205
      %p207 = scmp.le.s32.totalorder 1, %s21
      %p208 = scmp.lt.s32.totalorder %s21, 3
      %p209 = pnand %p207, %p208
      %p210 = pneg %p209
      // Predicated region
      $region9: #{tpu_custom_call.1} parent=5 // pred_check
        _
      $region10: #{tpu_custom_call.1} parent=5 // pred_check_branch
        %212 = sbr.rel (%p209) target = $region12
      $region11: #{tpu_custom_call.1} parent=5 // pred_region
        %s213 = ssub.s32 %s21, 1
        // Predicated region
        $region13: #{tpu_custom_call.1} parent=11 // pred_check
          %p214 = pneg %p68
        $region14: #{tpu_custom_call.1} parent=11 // pred_check_branch
          %216 = sbr.rel (%p214) target = $region16
        $region15: #{tpu_custom_call.1} parent=11 // pred_region
          %218 = vsyncadd [#allocation6], 0
          %s219 = sshll.u32 %s1, 4
          %s220 = int_to_ptr.hbm [resolvable:$true] %s219
          %s221 = sshll.u32 [#allocation5], 4
          %s222 = int_to_ptr.vmem [resolvable:$true] %s221
          %227 = dma.hbm_to_vmem [thread:$0]  %s220, 512, %s222, [#allocation6], 128, 128, 8
        $region16: #{tpu_custom_call.1} parent=11 // pred_fallthru
          _
        // Predicated region
        $region17: #{tpu_custom_call.1} parent=11 // pred_check
          %p228 = pneg %p89
        $region18: #{tpu_custom_call.1} parent=11 // pred_check_branch
          %230 = sbr.rel (%p228) target = $region20
        $region19: #{tpu_custom_call.1} parent=11 // pred_region
          %232 = vsyncadd [#allocation6], 0
          %s233 = sshll.u32 %s2, 4
          %s234 = int_to_ptr.hbm [resolvable:$true] %s233
          %s235 = sshll.u32 [#allocation7], 4
          %s236 = int_to_ptr.vmem [resolvable:$true] %s235
          %241 = dma.hbm_to_vmem [thread:$0]  %s234, 512, %s236, [#allocation6], 128, 128, 8
        $region20: #{tpu_custom_call.1} parent=11 // pred_fallthru
          _
        // Predicated region
        $region21: #{tpu_custom_call.1} parent=11 // pred_check
          %p242 = pneg %p110
        $region22: #{tpu_custom_call.1} parent=11 // pred_check_branch
          %244 = sbr.rel (%p242) target = $region24
        $region23: #{tpu_custom_call.1} parent=11 // pred_region
          %246 = vsyncadd [#allocation9], 0
          %s247 = sshll.u32 %s3, 4
          %s248 = int_to_ptr.hbm [resolvable:$true] %s247
          %s249 = sshll.u32 [#allocation8], 4
          %s250 = int_to_ptr.vmem [resolvable:$true] %s249
          %255 = dma.hbm_to_vmem [thread:$0]  %s248, 512, %s250, [#allocation9], 128, 128, 8
        $region24: #{tpu_custom_call.1} parent=11 // pred_fallthru
          _
        // Predicated region
        $region25: #{tpu_custom_call.1} parent=11 // pred_check
          %p256 = pneg %p131
        $region26: #{tpu_custom_call.1} parent=11 // pred_check_branch
          %258 = sbr.rel (%p256) target = $region28
        $region27: #{tpu_custom_call.1} parent=11 // pred_region
          _
        $region28: #{tpu_custom_call.1} parent=11 // pred_fallthru
          _
        // Predicated region
        $region29: #{tpu_custom_call.1} parent=11 // pred_check
          %p259 = pneg %p152
        $region30: #{tpu_custom_call.1} parent=11 // pred_check_branch
          %261 = sbr.rel (%p259) target = $region32
        $region31: #{tpu_custom_call.1} parent=11 // pred_region
          _
        $region32: #{tpu_custom_call.1} parent=11 // pred_fallthru
          _
        // Predicated region
        $region33: #{tpu_custom_call.1} parent=11 // pred_check
          %p262 = pneg %p173
        $region34: #{tpu_custom_call.1} parent=11 // pred_check_branch
          %264 = sbr.rel (%p262) target = $region36
        $region35: #{tpu_custom_call.1} parent=11 // pred_region
          _
        $region36: #{tpu_custom_call.1} parent=11 // pred_fallthru
          _
      $region12: #{tpu_custom_call.1} parent=5 // pred_fallthru
        _
      %p265 = scmp.lt.s32.totalorder %s21, 2
      // Predicated region
      $region37: #{tpu_custom_call.1} parent=5 // pred_check
        %p266 = pneg %p265
      $region38: #{tpu_custom_call.1} parent=5 // pred_check_branch
        %268 = sbr.rel (%p266) target = $region40
      $region39: #{tpu_custom_call.1} parent=5 // pred_region
        // Predicated region
        $region41: #{tpu_custom_call.1} parent=39 // pred_check
          %p269 = pneg %p41
        $region42: #{tpu_custom_call.1} parent=39 // pred_check_branch
          %271 = sbr.rel (%p269) target = $region44
        $region43: #{tpu_custom_call.1} parent=39 // pred_region
          %s272 = sand.u32 %s31, 1
          %s273 = scalar_lea.sflag [#allocation3], %s272
          %s274 = sand.u32 %s31, 1
          %s275 = smul.addr %s274, 8
          %s276 = scalar_lea.vmem [#allocation2], %s275
          %278 = vsyncadd %s273, 0
          %s279 = smul.addr %s21, 8
          %s280 = scalar_lea.hbm %s0, %s279
          %s282 = sshll.u32 %s280, 4
          %s283 = int_to_ptr.hbm [resolvable:$true] %s282
          %s284 = sshll.u32 %s276, 4
          %s285 = int_to_ptr.vmem [resolvable:$true] %s284
          %287 = dma.hbm_to_vmem [thread:$0]  %s283, 128, %s285, %s273
        $region44: #{tpu_custom_call.1} parent=39 // pred_fallthru
          _
      $region40: #{tpu_custom_call.1} parent=5 // pred_fallthru
        _
      %p288 = scmp.le.s32.totalorder 1, %s21
      %p289 = scmp.lt.s32.totalorder %s21, 3
      %p290 = pnand %p288, %p289
      %p291 = pneg %p290
      // Predicated region
      $region45: #{tpu_custom_call.1} parent=5 // pred_check
        _
      $region46: #{tpu_custom_call.1} parent=5 // pred_check_branch
        %293 = sbr.rel (%p290) target = $region48
      $region47: #{tpu_custom_call.1} parent=5 // pred_region
        %s294 = ssub.s32 %s21, 1
        %s295 = sand.u32 %s34, 1
        %s296 = scalar_lea.sflag [#allocation3], %s295
        %s297 = sand.u32 %s34, 1
        %s298 = smul.addr %s297, 8
        %s299 = scalar_lea.vmem [#allocation2], %s298
        // Predicated region
        $region49: #{tpu_custom_call.1} parent=47 // pred_check
          %p300 = pneg %p47
        $region50: #{tpu_custom_call.1} parent=47 // pred_check_branch
          %302 = sbr.rel (%p300) target = $region52
        $region51: #{tpu_custom_call.1} parent=47 // pred_region
          %304 = dma.done %s296, 128
        $region52: #{tpu_custom_call.1} parent=47 // pred_fallthru
          _
        // Predicated region
        $region53: #{tpu_custom_call.1} parent=47 // pred_check
          %p305 = pneg %p68
        $region54: #{tpu_custom_call.1} parent=47 // pred_check_branch
          %307 = sbr.rel (%p305) target = $region56
        $region55: #{tpu_custom_call.1} parent=47 // pred_region
          %309 = dma.done [#allocation6], 512
        $region56: #{tpu_custom_call.1} parent=47 // pred_fallthru
          _
        // Predicated region
        $region57: #{tpu_custom_call.1} parent=47 // pred_check
          %p310 = pneg %p89
        $region58: #{tpu_custom_call.1} parent=47 // pred_check_branch
          %312 = sbr.rel (%p310) target = $region60
        $region59: #{tpu_custom_call.1} parent=47 // pred_region
          %314 = dma.done [#allocation6], 512
        $region60: #{tpu_custom_call.1} parent=47 // pred_fallthru
          _
        // Predicated region
        $region61: #{tpu_custom_call.1} parent=47 // pred_check
          %p315 = pneg %p110
        $region62: #{tpu_custom_call.1} parent=47 // pred_check_branch
          %317 = sbr.rel (%p315) target = $region64
        $region63: #{tpu_custom_call.1} parent=47 // pred_region
          %319 = dma.done [#allocation9], 512
        $region64: #{tpu_custom_call.1} parent=47 // pred_fallthru
          _
        %s320 = sand.u32 %s34, 1
        %s321 = scalar_lea.sflag [#allocation3], %s320
        %s322 = sand.u32 %s34, 1
        %s323 = smul.addr %s322, 8
        %s324 = scalar_lea.vmem [#allocation2], %s323
        %p325 = pneg %p47
        %p326 = pneg %p44
        %p327 = pneg %p68
        %p328 = pneg %p65
        %p329 = pneg %p89
        %p330 = pneg %p86
        %p331 = pneg %p110
        %p332 = pneg %p107
        %p333 = pneg %p131
        %p334 = pneg %p128
        %p335 = pneg %p152
        %p336 = pneg %p149
        %p337 = pneg %p173
        %p338 = pneg %p170
        %p339 = pneg %p199
        %p340 = pneg %p196
        %s341 = sand.u32 %s186, 1
        %s342 = scalar_lea.sflag [#allocation4], %s341
        %s343 = sand.u32 %s186, 1
        %s344 = smul.addr %s343, 8
        %s345 = scalar_lea.vmem [#allocation10], %s344
        %v346 = vld [vmem:[%s299] sm:$0xff]
        %v347 = vld [vmem:[#allocation5] sm:$0xff]
        %v348 = vld [vmem:[#allocation5 + $0x8] sm:$0xff]
        %v349 = vld [vmem:[#allocation5 + $0x10] sm:$0xff]
        %v350 = vld [vmem:[#allocation5 + $0x18] sm:$0xff]
        %v351 = vld [vmem:[%s4] sm:$0x1]
        %v353 = vperm.slane %v351, 0
        %vm355 = vcmask 261120
        %v357 = vsel %vm355, %v346, 0
        %359 = vmatpush.msra.mxu0 0.0
        %360 = vmatpush.msra.mxu0 0.0
        %361 = vmatpush.msra.mxu0 0.0
        %362 = vmatpush.msra.mxu0 0.0
        %363 = vmatpush.msra.mxu0 0.0
        %364 = vmatpush.msra.mxu0 0.0
        %365 = vmatpush.msra.mxu0 0.0
        %366 = vmatpush.msra.mxu0 0.0
        %367 = vmatpush.msra.mxu0 0.0
        %368 = vmatpush.msra.mxu0 0.0
        %369 = vmatpush.msra.mxu0 0.0
        %370 = vmatpush.msra.mxu0 0.0
        %371 = vmatpush.msra.mxu0 %v350
        %372 = vmatpush.msra.mxu0 %v349
        %373 = vmatpush.msra.mxu0 %v348
        %374 = vmatpush.msra.mxu0 %v347
        %375 = vmatmul.f32.gmra.mxu0 %v357
        %v376 = vpop.f32.mrf.mxu0
        %v377 = vadd.f32 %v353, %v376
        %378 = vdwg.mxu0
        %v379 = vld [vmem:[#allocation7] sm:$0xff]
        %v380 = vld [vmem:[#allocation7 + $0x8] sm:$0xff]
        %v381 = vld [vmem:[#allocation7 + $0x10] sm:$0xff]
        %v382 = vld [vmem:[#allocation7 + $0x18] sm:$0xff]
        %v383 = vld [vmem:[%s5] sm:$0x1]
        %v385 = vperm.slane %v383, 0
        %387 = vmatpush.msra.mxu0 0.0
        %388 = vmatpush.msra.mxu0 0.0
        %389 = vmatpush.msra.mxu0 0.0
        %390 = vmatpush.msra.mxu0 0.0
        %391 = vmatpush.msra.mxu0 0.0
        %392 = vmatpush.msra.mxu0 0.0
        %393 = vmatpush.msra.mxu0 0.0
        %394 = vmatpush.msra.mxu0 0.0
        %395 = vmatpush.msra.mxu0 0.0
        %396 = vmatpush.msra.mxu0 0.0
        %397 = vmatpush.msra.mxu0 0.0
        %398 = vmatpush.msra.mxu0 0.0
        %399 = vmatpush.msra.mxu0 %v382
        %400 = vmatpush.msra.mxu0 %v381
        %401 = vmatpush.msra.mxu0 %v380
        %402 = vmatpush.msra.mxu0 %v379
        %403 = vmatmul.f32.gmra.mxu0 %v357
        %v404 = vpop.f32.mrf.mxu0
        %v405 = vadd.f32 %v385, %v404
        %406 = vdwg.mxu0
        %v407 = vld [vmem:[#allocation8] sm:$0xff]
        %v408 = vld [vmem:[#allocation8 + $0x8] sm:$0xff]
        %v409 = vld [vmem:[#allocation8 + $0x10] sm:$0xff]
        %v410 = vld [vmem:[#allocation8 + $0x18] sm:$0xff]
        %v411 = vld [vmem:[%s6] sm:$0x1]
        %v413 = vperm.slane %v411, 0
        %415 = vmatpush.msra.mxu0 0.0
        %416 = vmatpush.msra.mxu0 0.0
        %417 = vmatpush.msra.mxu0 0.0
        %418 = vmatpush.msra.mxu0 0.0
        %419 = vmatpush.msra.mxu0 0.0
        %420 = vmatpush.msra.mxu0 0.0
        %421 = vmatpush.msra.mxu0 0.0
        %422 = vmatpush.msra.mxu0 0.0
        %423 = vmatpush.msra.mxu0 0.0
        %424 = vmatpush.msra.mxu0 0.0
        %425 = vmatpush.msra.mxu0 0.0
        %426 = vmatpush.msra.mxu0 0.0
        %427 = vmatpush.msra.mxu0 %v410
        %428 = vmatpush.msra.mxu0 %v409
        %429 = vmatpush.msra.mxu0 %v408
        %430 = vmatpush.msra.mxu0 %v407
        %431 = vmatmul.f32.gmra.mxu0 %v357
        %v432 = vpop.f32.mrf.mxu0
        %v433 = vadd.f32 %v413, %v432
        %434 = vdwg.mxu0
        %v436 = vsel %vm355, %v377, 0
        %v439 = vsel %vm355, %v405, 0
        %441 = vmatpush.xpose.msra.mxu0 0.0
        %442 = vmatpush.xpose.msra.mxu0 0.0
        %443 = vmatpush.xpose.msra.mxu0 0.0
        %444 = vmatpush.xpose.msra.mxu0 0.0
        %445 = vmatpush.xpose.msra.mxu0 0.0
        %446 = vmatpush.xpose.msra.mxu0 0.0
        %447 = vmatpush.xpose.msra.mxu0 0.0
        %448 = vmatpush.xpose.msra.mxu0 0.0
        %449 = vmatpush.xpose.msra.mxu0 0.0
        %450 = vmatpush.xpose.msra.mxu0 0.0
        %451 = vmatpush.xpose.msra.mxu0 0.0
        %452 = vmatpush.xpose.msra.mxu0 0.0
        %453 = vmatpush.xpose.msra.mxu0 0.0
        %454 = vmatpush.xpose.msra.mxu0 0.0
        %455 = vmatpush.xpose.msra.mxu0 0.0
        %456 = vmatpush.xpose.msra.mxu0 %v439
        %457 = vmatmul.f32.gmra.mxu0 %v436
        %v458 = vpop.f32.mrf.mxu0
        %v459 = vadd.f32 0.0, %v458
        %460 = vdwg.mxu0
        %v461 = vmul.f32 %v459, 0.17677669
        %vm462 = vcmask 64512
        %v463 = vsel %vm462, %v461, -inf
        %464 = vmax.xlane.f32.xlu0 %v463
        %v465 = vpop.xlane.xlu0 %464
        %v466 = vsub.f32 %v461, %v465
        %v467 = vmul.f32 %v466, 1.442695
        %v468 = vpow.pop %v467
        %v469 = vsel %vm462, %v468, 0.0
        %470 = vadd.xlane.f32.xlu0 %v469
        %v471 = vpop.xlane.xlu0 %470
        %v472 = vrcp.pop %v471
        %v473 = vmul.f32 %v468, %v472
        %v475 = vsel %vm462, %v473, 0
        %477 = vmatpush.msra.mxu0 0.0
        %478 = vmatpush.msra.mxu0 0.0
        %479 = vmatpush.msra.mxu0 0.0
        %480 = vmatpush.msra.mxu0 0.0
        %481 = vmatpush.msra.mxu0 0.0
        %482 = vmatpush.msra.mxu0 0.0
        %483 = vmatpush.msra.mxu0 0.0
        %484 = vmatpush.msra.mxu0 0.0
        %485 = vmatpush.msra.mxu0 0.0
        %486 = vmatpush.msra.mxu0 0.0
        %487 = vmatpush.msra.mxu0 0.0
        %488 = vmatpush.msra.mxu0 0.0
        %489 = vmatpush.msra.mxu0 0.0
        %490 = vmatpush.msra.mxu0 0.0
        %491 = vmatpush.msra.mxu0 0.0
        %492 = vmatpush.msra.mxu0 %v433
        %493 = vmatmul.f32.gmra.mxu0 %v475
        %v494 = vpop.f32.mrf.mxu0
        %v495 = vadd.f32 0.0, %v494
        %496 = vdwg.mxu0
        %497 = vst.msk [vmem:[%s345] sm:$0xff] %vm355, %v495
        %s498 = sand.u32 %s186, 1
        %s499 = scalar_lea.sflag [#allocation4], %s498
        %s500 = sand.u32 %s186, 1
        %s501 = smul.addr %s500, 8
        %s502 = scalar_lea.vmem [#allocation10], %s501
        // Predicated region
        $region65: #{tpu_custom_call.1} parent=47 // pred_check
          %p503 = pneg %p196
        $region66: #{tpu_custom_call.1} parent=47 // pred_check_branch
          %505 = sbr.rel (%p503) target = $region68
        $region67: #{tpu_custom_call.1} parent=47 // pred_region
          %507 = vsyncadd %s499, 0
          %s508 = smul.addr %s26, 8
          %s509 = scalar_lea.hbm %s7, %s508
          %s511 = sshll.u32 %s502, 4
          %s512 = int_to_ptr.vmem [resolvable:$true] %s511
          %s513 = sshll.u32 %s509, 4
          %s514 = int_to_ptr.hbm [resolvable:$true] %s513
          %516 = dma.vmem_to_hbm [thread:$0]  %s512, 128, %s514, %s499
        $region68: #{tpu_custom_call.1} parent=47 // pred_fallthru
          _
      $region48: #{tpu_custom_call.1} parent=5 // pred_fallthru
        _
      %p517 = scmp.le.s32.totalorder 2, %s21
      // Predicated region
      $region69: #{tpu_custom_call.1} parent=5 // pred_check
        %p518 = pneg %p517
      $region70: #{tpu_custom_call.1} parent=5 // pred_check_branch
        %520 = sbr.rel (%p518) target = $region72
      $region71: #{tpu_custom_call.1} parent=5 // pred_region
        %s521 = ssub.s32 %s21, 2
        // Predicated region
        $region73: #{tpu_custom_call.1} parent=71 // pred_check
          %p522 = pneg %p202
        $region74: #{tpu_custom_call.1} parent=71 // pred_check_branch
          %524 = sbr.rel (%p522) target = $region76
        $region75: #{tpu_custom_call.1} parent=71 // pred_region
          %s525 = sand.u32 %s187, 1
          %s526 = scalar_lea.sflag [#allocation4], %s525
          %s527 = sand.u32 %s187, 1
          %s528 = smul.addr %s527, 8
          %s529 = scalar_lea.vmem [#allocation10], %s528
          %531 = dma.done %s526, 128
        $region76: #{tpu_custom_call.1} parent=71 // pred_fallthru
          _
      $region72: #{tpu_custom_call.1} parent=5 // pred_fallthru
        _
    $region6: #{tpu_custom_call.1} parent=1 // loop_footer
      %s25 = sadd.s32 1, %s21
    $region7: #{tpu_custom_call.1} parent=1 // loop_footer_branch
      %20 = sbr.rel target = $region3
    $region8: #{tpu_custom_call.1} parent=1 // loop_exit
      _
    %532 = vsyncpa [#allocation3], 1
    %s533 = scalar_lea.sflag [#allocation3], 1
    %534 = vsyncpa %s533, 1
    %535 = vsyncpa [#allocation6], 1
    %536 = vsyncpa [#allocation9], 1
    %537 = vsyncpa [#allocation4], 1
    %s538 = scalar_lea.sflag [#allocation4], 1
    %539 = vsyncpa %s538, 1

</llo_original>
